<compile_context>
chip_gen: v7x
topology: tpu7x:2x2x1
jax: 0.10.0
libtpu: 0.0.40
codegen_flags: <defaults>
</compile_context>

<pallas_src>
import functools

import numpy as np

import jax
import jax.numpy as jnp
from jax.experimental import pallas as pl
from jax.experimental.pallas import tpu as pltpu


# ---------------------------------------------------------------------------
# in-kernel helpers
# ---------------------------------------------------------------------------
def _quantize(v):
    # np.uint8(v * 255) for v in [0, 1)  ==  floor(v * 255).
    # TODO(synk): x >= 1.0 or x < 0 would wrap under uint8; not emulated (documented range).
    return jnp.floor(v.astype(jnp.float32) * 255.0)


def _nbr_left(v):
    # col j -> col j-1 ; col -1 reflects (BORDER_REFLECT_101) to col 1.
    return jnp.concatenate([v[:, 1:2], v[:, :-1]], axis=1)


def _nbr_right(v):
    # col j -> col j+1 ; col W reflects to col W-2.
    return jnp.concatenate([v[:, 1:], v[:, -2:-1]], axis=1)


def _sobel_sq_magnitude(x_ref, halo_ref, use_roll):
    """Quantize + separable 3x3 Sobel; returns Gx^2 + Gy^2 for one (th, W) tile.

    halo_ref holds the two reflect-101 neighbour rows for this tile: row 0 is the row
    "above" the tile, row 1 the row "below" (resolved to image rows by the wrapper).
    """
    cur = _quantize(x_ref[...])        # (th, W)
    halo = _quantize(halo_ref[...])    # (2, W)
    top = halo[0:1, :]
    bot = halo[1:2, :]
    th, w = cur.shape

    if use_roll:
        # Aligned tile: shifted operands via XLU rolls + boundary fix-ups, so the
        # vld/vst slots stay free for the HBM-bound pipeline.
        row = jax.lax.broadcasted_iota(jnp.int32, (th, w), 0)
        col = jax.lax.broadcasted_iota(jnp.int32, (th, w), 1)
        up = jnp.where(row == 0, top, pltpu.roll(cur, shift=1, axis=0))
        down = jnp.where(row == th - 1, bot, pltpu.roll(cur, shift=th - 1, axis=0))
        a = up + 2.0 * cur + down          # vertical [1, 2, 1]   (smooth)
        b = down - up                      # vertical [-1, 0, 1]  (derivative)
        a_l = pltpu.roll(a, shift=1, axis=1)       # a[:, j-1] (wraps at j=0)
        a_r = pltpu.roll(a, shift=w - 1, axis=1)   # a[:, j+1] (wraps at j=W-1)
        b_l = pltpu.roll(b, shift=1, axis=1)
        b_r = pltpu.roll(b, shift=w - 1, axis=1)
        # Reflect-101 fix-ups reuse the opposite roll: col -1 -> col 1, col W -> col W-2.
        left_a = jnp.where(col == 0, a_r, a_l)
        right_a = jnp.where(col == w - 1, a_l, a_r)
        left_b = jnp.where(col == 0, b_r, b_l)
        right_b = jnp.where(col == w - 1, b_l, b_r)
        sx = right_a - left_a
        sy = left_b + 2.0 * b + right_b
    else:
        # Unaligned (small) tiles: concat/slice construction (correct for any shape).
        up = jnp.concatenate([top, cur[:-1, :]], axis=0)
        down = jnp.concatenate([cur[1:, :], bot], axis=0)
        a = up + 2.0 * cur + down
        b = down - up
        sx = _nbr_right(a) - _nbr_left(a)
        sy = _nbr_left(b) + 2.0 * b + _nbr_right(b)

    return sx * sx + sy * sy


# ---------------------------------------------------------------------------
# kernels
# ---------------------------------------------------------------------------
def _sobel_minmax_kernel(x_ref, halo_ref, mn_ref, mx_ref, *, use_roll):
    sq = _sobel_sq_magnitude(x_ref, halo_ref, use_roll)
    # Per-tile scalars broadcast into aligned (8, 128) slabs -> lane-dense stores.
    mn_ref[...] = jnp.full(mn_ref.shape, jnp.min(sq), dtype=mn_ref.dtype)
    mx_ref[...] = jnp.full(mx_ref.shape, jnp.max(sq), dtype=mx_ref.dtype)


def _sobel_normalize_kernel(so_ref, x_ref, halo_ref, o_ref, *, use_roll):
    sq = _sobel_sq_magnitude(x_ref, halo_ref, use_roll)
    n = pl.program_id(0)
    scale = so_ref[n, 0]     # per-image 1/(max-min), scalar read from SMEM
    offset = so_ref[n, 1]    # per-image -min/(max-min)
    # TODO(synk): for W not a multiple of 128 this store is a masked vst; real images
    # should use a lane-dense W for unmasked output stores.
    o_ref[...] = (jnp.sqrt(sq) * scale + offset).astype(o_ref.dtype)


# ---------------------------------------------------------------------------
# wrapper
# ---------------------------------------------------------------------------
def _pick_tile_rows(H, W, budget_bytes):
    """Largest divisor of H that is a multiple of 8 (or H itself) fitting the byte budget."""
    divisors = [d for d in range(1, H + 1) if H % d == 0 and (d % 8 == 0 or d == H)]
    fitting = [d for d in divisors if d * W * 4 <= budget_bytes]
    if fitting:
        return max(fitting)
    # Nothing fits (e.g. near-prime H with huge W): take the smallest legal tile; the
    # VMEM limit below is sized from the actual tile so this stays compilable.
    # TODO(synk): pad H (or mask a ragged last tile) instead of oversizing in this case.
    return min(divisors)


@functools.partial(jax.jit, static_argnames=("tile_budget_bytes",))
def sobel_filter_opencv(x, *, tile_budget_bytes=2 * 1024 * 1024):
    """x: (N, C, H, W) with values in [0, 1). Returns float32 (N, C, H, W)."""
    N, C, H, W = x.shape
    if H < 2 or W < 2:
        raise ValueError("BORDER_REFLECT_101 requires H >= 2 and W >= 2")
    xf = x.astype(jnp.float32)

    # ~2 MiB tiles reach the 85%+ of-HBM-roofline regime while keeping the (<= ~16x tile)
    # working set far under v7x's 64 MiB physical VMEM; v5e/v6e have 128 MiB of headroom.
    th = _pick_tile_rows(H, W, tile_budget_bytes)
    nH = H // th
    use_roll = (W % 128 == 0) and (th % 8 == 0)

    # Reflect-101 halo rows: one merged (2, W) pair per row tile (single tiny DMA/step).
    h_idx = np.arange(nH)
    top_rows = np.where(h_idx == 0, 1, h_idx * th - 1)
    bot_rows = np.where(h_idx == nH - 1, H - 2, (h_idx + 1) * th)
    halo_rows = np.stack([top_rows, bot_rows], axis=1).reshape(-1)   # (nH * 2,)
    halo = xf[:, :, halo_rows, :].reshape(N, C, nH, 2, W)

    grid = (N, C, nH)
    x_spec = pl.BlockSpec((pl.Squeezed(), pl.Squeezed(), th, W),
                          lambda n, c, h: (n, c, h, 0))
    halo_spec = pl.BlockSpec((pl.Squeezed(), pl.Squeezed(), pl.Squeezed(), 2, W),
                             lambda n, c, h: (n, c, h, 0, 0))
    stat_spec = pl.BlockSpec((pl.Squeezed(), pl.Squeezed(), pl.Squeezed(), 8, 128),
                             lambda n, c, h: (n, c, h, 0, 0))
    smem_spec = pl.BlockSpec(memory_space=pltpu.MemorySpace.SMEM)

    tile_bytes = th * W * 4
    vmem_limit = int(min(48 * 1024 * 1024,
                         max(24 * 1024 * 1024, 16 * tile_bytes + 2 * 1024 * 1024)))
    cparams = pltpu.CompilerParams(
        dimension_semantics=("parallel", "parallel", "parallel"),
        vmem_limit_bytes=vmem_limit)

    elems = N * C * H * W
    halo_bytes = N * C * nH * 2 * W * 4
    cost1 = pl.CostEstimate(flops=18 * elems, transcendentals=0,
                            bytes_accessed=4 * elems + halo_bytes + N * C * nH * 8 * 128 * 8)
    cost2 = pl.CostEstimate(flops=20 * elems, transcendentals=elems,
                            bytes_accessed=8 * elems + halo_bytes + 8 * N)

    # Pass 1: per-tile min / max of the squared Sobel magnitude.
    mn_t, mx_t = pl.pallas_call(
        functools.partial(_sobel_minmax_kernel, use_roll=use_roll),
        out_shape=(jax.ShapeDtypeStruct((N, C, nH, 8, 128), jnp.float32),
                   jax.ShapeDtypeStruct((N, C, nH, 8, 128), jnp.float32)),
        grid=grid,
        in_specs=[x_spec, halo_spec],
        out_specs=(stat_spec, stat_spec),
        compiler_params=cparams,
        cost_estimate=cost1,
    )(xf, halo)

    # sqrt is monotone: reduce the squared magnitude, sqrt only the two reduced scalars.
    mn = jnp.sqrt(jnp.min(mn_t, axis=(1, 2, 3, 4)))   # (N,) per-image global min
    mx = jnp.sqrt(jnp.max(mx_t, axis=(1, 2, 3, 4)))   # (N,) per-image global max
    # cv2.normalize divides by (max - min) unguarded; we deliberately guard flat images.
    denom = jnp.where(mx > mn, mx - mn, jnp.float32(1.0))
    scale_offset = jnp.stack([1.0 / denom, -mn / denom], axis=1).astype(jnp.float32)  # (N, 2)

    # Pass 2: recompute the magnitude (cheaper than an HBM round trip of it on v5e/v6e)
    # and apply the per-image affine normalization with SMEM scalars.
    out = pl.pallas_call(
        functools.partial(_sobel_normalize_kernel, use_roll=use_roll),
        out_shape=jax.ShapeDtypeStruct((N, C, H, W), jnp.float32),
        grid=grid,
        in_specs=[smem_spec, x_spec, halo_spec],
        out_specs=x_spec,
        compiler_params=cparams,
        cost_estimate=cost2,
    )(scale_offset, xf, halo)
    return out


# ---------------------------------------------------------------------------
# pure-JAX reference (mirrors the cv2 pipeline) for validation
# ---------------------------------------------------------------------------
def _reference_sobel(x):
    q = jnp.floor(x.astype(jnp.float32) * 255.0)
    p = jnp.pad(q, ((0, 0), (0, 0), (1, 1), (1, 1)), mode="reflect")
    kx = jnp.array([[-1., 0., 1.], [-2., 0., 2.], [-1., 0., 1.]], jnp.float32)
    ky = jnp.array([[-1., -2., -1.], [0., 0., 0.], [1., 2., 1.]], jnp.float32)
    H, W = x.shape[2], x.shape[3]
    gx = jnp.zeros_like(q)
    gy = jnp.zeros_like(q)
    for di in range(3):
        for dj in range(3):
            win = p[:, :, di:di + H, dj:dj + W]
            gx = gx + kx[di, dj] * win
            gy = gy + ky[di, dj] * win
    mag = jnp.sqrt(gx * gx + gy * gy)
    mn = jnp.min(mag, axis=(1, 2, 3), keepdims=True)
    mx = jnp.max(mag, axis=(1, 2, 3), keepdims=True)
    denom = jnp.where(mx > mn, mx - mn, 1.0)
    return (mag - mn) / denom


if __name__ == "__main__":
    # Case 1: small unaligned image (concat/slice path), single row tile per channel.
    x1 = jax.random.uniform(jax.random.PRNGKey(0), (2, 4, 16, 16), dtype=jnp.float32)
    y1 = sobel_filter_opencv(x1)
    jax.block_until_ready(y1)
    assert y1.shape == x1.shape and y1.dtype == jnp.float32
    y1_ref = _reference_sobel(x1)
    assert jnp.allclose(y1, y1_ref, atol=2e-5, rtol=2e-5), float(jnp.max(jnp.abs(y1 - y1_ref)))

    # Case 2: multi-row-tile halo path (tiny budget forces 8-row tiles -> 3 tiles over H=24).
    x2 = jax.random.uniform(jax.random.PRNGKey(1), (1, 3, 24, 24), dtype=jnp.float32)
    y2 = sobel_filter_opencv(x2, tile_budget_bytes=1024)
    jax.block_until_ready(y2)
    assert jnp.allclose(y2, _reference_sobel(x2), atol=2e-5, rtol=2e-5)

    # Case 3: (8,128)-aligned tiles -> pltpu.roll fast path with multiple row tiles.
    x3 = jax.random.uniform(jax.random.PRNGKey(2), (1, 2, 32, 128), dtype=jnp.float32)
    y3 = sobel_filter_opencv(x3, tile_budget_bytes=4096)
    jax.block_until_ready(y3)
    assert jnp.allclose(y3, _reference_sobel(x3), atol=2e-5, rtol=2e-5)

    print("KERNEL_OK")
</pallas_src>

<mosaic_0001>
module attributes {stable_mosaic.version = 11 : i64} {
  func.func @_sobel_minmax_kernel(%arg0: i32, %arg1: i32, %arg2: i32, %arg3: memref<1x1x16x16xf32, #tpu.memory_space<vmem>>, %arg4: memref<1x1x1x2x16xf32, #tpu.memory_space<vmem>>, %arg5: memref<1x1x1x8x128xf32, #tpu.memory_space<vmem>>, %arg6: memref<1x1x1x8x128xf32, #tpu.memory_space<vmem>>) attributes {dimension_semantics = [#tpu.dimension_semantics<parallel>, #tpu.dimension_semantics<parallel>, #tpu.dimension_semantics<parallel>], iteration_bounds = array<i64: 2, 4, 1>, scalar_prefetch = 0 : i64, scratch_operands = 0 : i64, tpu.core_type = #tpu.core_type<tc>, window_params = [{transform_indices = @transform_0, window_bounds = array<i64: 1, 1, 16, 16>}, {transform_indices = @transform_1, window_bounds = array<i64: 1, 1, 1, 2, 16>}, {transform_indices = @transform_2, window_bounds = array<i64: 1, 1, 1, 8, 128>}, {transform_indices = @transform_3, window_bounds = array<i64: 1, 1, 1, 8, 128>}]} {
    %c0 = arith.constant 0 : index
    %c0_0 = arith.constant 0 : index
    %c0_1 = arith.constant 0 : index
    %c0_2 = arith.constant 0 : index
    %0 = vector.load %arg3[%c0, %c0_0, %c0_1, %c0_2] : memref<1x1x16x16xf32, #tpu.memory_space<vmem>>, vector<1x1x16x16xf32>
    %1 = vector.shape_cast %0 : vector<1x1x16x16xf32> to vector<16x16xf32>
    %cst = arith.constant 2.550000e+02 : f32
    %2 = vector.broadcast %cst : f32 to vector<16x16xf32>
    %3 = arith.mulf %1, %2 : vector<16x16xf32>
    %4 = math.floor %3 : vector<16x16xf32>
    %c0_3 = arith.constant 0 : index
    %c0_4 = arith.constant 0 : index
    %c0_5 = arith.constant 0 : index
    %c0_6 = arith.constant 0 : index
    %c0_7 = arith.constant 0 : index
    %5 = vector.load %arg4[%c0_3, %c0_4, %c0_5, %c0_6, %c0_7] : memref<1x1x1x2x16xf32, #tpu.memory_space<vmem>>, vector<1x1x1x2x16xf32>
    %6 = vector.shape_cast %5 : vector<1x1x1x2x16xf32> to vector<2x16xf32>
    %cst_8 = arith.constant 2.550000e+02 : f32
    %7 = vector.broadcast %cst_8 : f32 to vector<2x16xf32>
    %8 = arith.mulf %6, %7 : vector<2x16xf32>
    %9 = math.floor %8 : vector<2x16xf32>
    %10 = vector.extract_strided_slice %9 {offsets = [0, 0], sizes = [1, 16], strides = [1, 1]} : vector<2x16xf32> to vector<1x16xf32>
    %11 = vector.extract_strided_slice %9 {offsets = [1, 0], sizes = [1, 16], strides = [1, 1]} : vector<2x16xf32> to vector<1x16xf32>
    %12 = vector.extract_strided_slice %4 {offsets = [0, 0], sizes = [15, 16], strides = [1, 1]} : vector<16x16xf32> to vector<15x16xf32>
    %13 = tpu.concatenate %10, %12 in 0 : vector<1x16xf32>, vector<15x16xf32> -> vector<16x16xf32>
    %14 = vector.extract_strided_slice %4 {offsets = [1, 0], sizes = [15, 16], strides = [1, 1]} : vector<16x16xf32> to vector<15x16xf32>
    %15 = tpu.concatenate %14, %11 in 0 : vector<15x16xf32>, vector<1x16xf32> -> vector<16x16xf32>
    %cst_9 = arith.constant 2.000000e+00 : f32
    %16 = vector.broadcast %cst_9 : f32 to vector<16x16xf32>
    %17 = arith.mulf %16, %4 : vector<16x16xf32>
    %18 = arith.addf %13, %17 : vector<16x16xf32>
    %19 = arith.addf %18, %15 : vector<16x16xf32>
    %20 = arith.subf %15, %13 : vector<16x16xf32>
    %21 = vector.extract_strided_slice %19 {offsets = [0, 1], sizes = [16, 15], strides = [1, 1]} : vector<16x16xf32> to vector<16x15xf32>
    %22 = vector.extract_strided_slice %19 {offsets = [0, 14], sizes = [16, 1], strides = [1, 1]} : vector<16x16xf32> to vector<16x1xf32>
    %23 = tpu.concatenate %21, %22 in 1 : vector<16x15xf32>, vector<16x1xf32> -> vector<16x16xf32>
    %24 = vector.extract_strided_slice %19 {offsets = [0, 1], sizes = [16, 1], strides = [1, 1]} : vector<16x16xf32> to vector<16x1xf32>
    %25 = vector.extract_strided_slice %19 {offsets = [0, 0], sizes = [16, 15], strides = [1, 1]} : vector<16x16xf32> to vector<16x15xf32>
    %26 = tpu.concatenate %24, %25 in 1 : vector<16x1xf32>, vector<16x15xf32> -> vector<16x16xf32>
    %27 = arith.subf %23, %26 : vector<16x16xf32>
    %28 = vector.extract_strided_slice %20 {offsets = [0, 1], sizes = [16, 1], strides = [1, 1]} : vector<16x16xf32> to vector<16x1xf32>
    %29 = vector.extract_strided_slice %20 {offsets = [0, 0], sizes = [16, 15], strides = [1, 1]} : vector<16x16xf32> to vector<16x15xf32>
    %30 = tpu.concatenate %28, %29 in 1 : vector<16x1xf32>, vector<16x15xf32> -> vector<16x16xf32>
    %cst_10 = arith.constant 2.000000e+00 : f32
    %31 = vector.broadcast %cst_10 : f32 to vector<16x16xf32>
    %32 = arith.mulf %31, %20 : vector<16x16xf32>
    %33 = arith.addf %30, %32 : vector<16x16xf32>
    %34 = vector.extract_strided_slice %20 {offsets = [0, 1], sizes = [16, 15], strides = [1, 1]} : vector<16x16xf32> to vector<16x15xf32>
    %35 = vector.extract_strided_slice %20 {offsets = [0, 14], sizes = [16, 1], strides = [1, 1]} : vector<16x16xf32> to vector<16x1xf32>
    %36 = tpu.concatenate %34, %35 in 1 : vector<16x15xf32>, vector<16x1xf32> -> vector<16x16xf32>
    %37 = arith.addf %33, %36 : vector<16x16xf32>
    %38 = arith.mulf %27, %27 : vector<16x16xf32>
    %39 = arith.mulf %37, %37 : vector<16x16xf32>
    %40 = arith.addf %38, %39 : vector<16x16xf32>
    %41 = vector.shape_cast %40 : vector<16x16xf32> to vector<1x16x16xf32>
    %cst_11 = arith.constant dense<0x7F800000> : vector<1xf32>
    %42 = vector.multi_reduction <minimumf>, %41, %cst_11 [1, 2] : vector<1x16x16xf32> to vector<1xf32>
    %43 = vector.shape_cast %42 : vector<1xf32> to vector<1x1x1xf32>
    %44 = vector.extract %43[0, 0, 0] : f32 from vector<1x1x1xf32>
    %45 = vector.broadcast %44 : f32 to vector<8x128xf32>
    %c0_12 = arith.constant 0 : index
    %c0_13 = arith.constant 0 : index
    %c0_14 = arith.constant 0 : index
    %c0_15 = arith.constant 0 : index
    %c0_16 = arith.constant 0 : index
    %46 = vector.load %arg5[%c0_12, %c0_13, %c0_14, %c0_15, %c0_16] : memref<1x1x1x8x128xf32, #tpu.memory_space<vmem>>, vector<1x1x1x8x128xf32>
    %47 = vector.shape_cast %46 : vector<1x1x1x8x128xf32> to vector<8x128xf32>
    %48 = vector.shape_cast %45 : vector<8x128xf32> to vector<1x1x1x8x128xf32>
    tpu.vector_store %arg5[%c0_12, %c0_13, %c0_14, %c0_15, %c0_16], %48 {strides = array<i32>} : memref<1x1x1x8x128xf32, #tpu.memory_space<vmem>>, vector<1x1x1x8x128xf32>,
    %49 = vector.shape_cast %40 : vector<16x16xf32> to vector<1x16x16xf32>
    %cst_17 = arith.constant dense<0xFF800000> : vector<1xf32>
    %50 = vector.multi_reduction <maximumf>, %49, %cst_17 [1, 2] : vector<1x16x16xf32> to vector<1xf32>
    %51 = vector.shape_cast %50 : vector<1xf32> to vector<1x1x1xf32>
    %52 = vector.extract %51[0, 0, 0] : f32 from vector<1x1x1xf32>
    %53 = vector.broadcast %52 : f32 to vector<8x128xf32>
    %c0_18 = arith.constant 0 : index
    %c0_19 = arith.constant 0 : index
    %c0_20 = arith.constant 0 : index
    %c0_21 = arith.constant 0 : index
    %c0_22 = arith.constant 0 : index
    %54 = vector.load %arg6[%c0_18, %c0_19, %c0_20, %c0_21, %c0_22] : memref<1x1x1x8x128xf32, #tpu.memory_space<vmem>>, vector<1x1x1x8x128xf32>
    %55 = vector.shape_cast %54 : vector<1x1x1x8x128xf32> to vector<8x128xf32>
    %56 = vector.shape_cast %53 : vector<8x128xf32> to vector<1x1x1x8x128xf32>
    tpu.vector_store %arg6[%c0_18, %c0_19, %c0_20, %c0_21, %c0_22], %56 {strides = array<i32>} : memref<1x1x1x8x128xf32, #tpu.memory_space<vmem>>, vector<1x1x1x8x128xf32>,
    return
  }
  func.func @transform_0(%arg0: i32, %arg1: i32, %arg2: i32) -> (i32, i32, i32, i32) {
    %c0_i32 = arith.constant 0 : i32
    %c0_i32_0 = arith.constant 0 : i32
    return %arg0, %arg1, %arg2, %c0_i32 : i32, i32, i32, i32
  }
  func.func @transform_1(%arg0: i32, %arg1: i32, %arg2: i32) -> (i32, i32, i32, i32, i32) {
    %c0_i32 = arith.constant 0 : i32
    %c0_i32_0 = arith.constant 0 : i32
    %c0_i32_1 = arith.constant 0 : i32
    return %arg0, %arg1, %arg2, %c0_i32, %c0_i32_0 : i32, i32, i32, i32, i32
  }
  func.func @transform_2(%arg0: i32, %arg1: i32, %arg2: i32) -> (i32, i32, i32, i32, i32) {
    %c0_i32 = arith.constant 0 : i32
    %c0_i32_0 = arith.constant 0 : i32
    %c0_i32_1 = arith.constant 0 : i32
    return %arg0, %arg1, %arg2, %c0_i32, %c0_i32_0 : i32, i32, i32, i32, i32
  }
  func.func @transform_3(%arg0: i32, %arg1: i32, %arg2: i32) -> (i32, i32, i32, i32, i32) {
    %c0_i32 = arith.constant 0 : i32
    %c0_i32_0 = arith.constant 0 : i32
    %c0_i32_1 = arith.constant 0 : i32
    return %arg0, %arg1, %arg2, %c0_i32, %c0_i32_0 : i32, i32, i32, i32, i32
  }
}

module attributes {stable_mosaic.version = 11 : i64} {
  func.func @_sobel_normalize_kernel(%arg0: i32, %arg1: i32, %arg2: i32, %arg3: memref<2x2xf32, #tpu.memory_space<smem>>, %arg4: memref<1x1x16x16xf32, #tpu.memory_space<vmem>>, %arg5: memref<1x1x1x2x16xf32, #tpu.memory_space<vmem>>, %arg6: memref<1x1x16x16xf32, #tpu.memory_space<vmem>>) attributes {dimension_semantics = [#tpu.dimension_semantics<parallel>, #tpu.dimension_semantics<parallel>, #tpu.dimension_semantics<parallel>], iteration_bounds = array<i64: 2, 4, 1>, scalar_prefetch = 0 : i64, scratch_operands = 0 : i64, tpu.core_type = #tpu.core_type<tc>, window_params = [{transform_indices = @transform_0, window_bounds = array<i64: 2, 2>}, {transform_indices = @transform_1, window_bounds = array<i64: 1, 1, 16, 16>}, {transform_indices = @transform_2, window_bounds = array<i64: 1, 1, 1, 2, 16>}, {transform_indices = @transform_3, window_bounds = array<i64: 1, 1, 16, 16>}]} {
    %c0 = arith.constant 0 : index
    %c0_0 = arith.constant 0 : index
    %c0_1 = arith.constant 0 : index
    %c0_2 = arith.constant 0 : index
    %0 = vector.load %arg4[%c0, %c0_0, %c0_1, %c0_2] : memref<1x1x16x16xf32, #tpu.memory_space<vmem>>, vector<1x1x16x16xf32>
    %1 = vector.shape_cast %0 : vector<1x1x16x16xf32> to vector<16x16xf32>
    %cst = arith.constant 2.550000e+02 : f32
    %2 = vector.broadcast %cst : f32 to vector<16x16xf32>
    %3 = arith.mulf %1, %2 : vector<16x16xf32>
    %4 = math.floor %3 : vector<16x16xf32>
    %c0_3 = arith.constant 0 : index
    %c0_4 = arith.constant 0 : index
    %c0_5 = arith.constant 0 : index
    %c0_6 = arith.constant 0 : index
    %c0_7 = arith.constant 0 : index
    %5 = vector.load %arg5[%c0_3, %c0_4, %c0_5, %c0_6, %c0_7] : memref<1x1x1x2x16xf32, #tpu.memory_space<vmem>>, vector<1x1x1x2x16xf32>
    %6 = vector.shape_cast %5 : vector<1x1x1x2x16xf32> to vector<2x16xf32>
    %cst_8 = arith.constant 2.550000e+02 : f32
    %7 = vector.broadcast %cst_8 : f32 to vector<2x16xf32>
    %8 = arith.mulf %6, %7 : vector<2x16xf32>
    %9 = math.floor %8 : vector<2x16xf32>
    %10 = vector.extract_strided_slice %9 {offsets = [0, 0], sizes = [1, 16], strides = [1, 1]} : vector<2x16xf32> to vector<1x16xf32>
    %11 = vector.extract_strided_slice %9 {offsets = [1, 0], sizes = [1, 16], strides = [1, 1]} : vector<2x16xf32> to vector<1x16xf32>
    %12 = vector.extract_strided_slice %4 {offsets = [0, 0], sizes = [15, 16], strides = [1, 1]} : vector<16x16xf32> to vector<15x16xf32>
    %13 = tpu.concatenate %10, %12 in 0 : vector<1x16xf32>, vector<15x16xf32> -> vector<16x16xf32>
    %14 = vector.extract_strided_slice %4 {offsets = [1, 0], sizes = [15, 16], strides = [1, 1]} : vector<16x16xf32> to vector<15x16xf32>
    %15 = tpu.concatenate %14, %11 in 0 : vector<15x16xf32>, vector<1x16xf32> -> vector<16x16xf32>
    %cst_9 = arith.constant 2.000000e+00 : f32
    %16 = vector.broadcast %cst_9 : f32 to vector<16x16xf32>
    %17 = arith.mulf %16, %4 : vector<16x16xf32>
    %18 = arith.addf %13, %17 : vector<16x16xf32>
    %19 = arith.addf %18, %15 : vector<16x16xf32>
    %20 = arith.subf %15, %13 : vector<16x16xf32>
    %21 = vector.extract_strided_slice %19 {offsets = [0, 1], sizes = [16, 15], strides = [1, 1]} : vector<16x16xf32> to vector<16x15xf32>
    %22 = vector.extract_strided_slice %19 {offsets = [0, 14], sizes = [16, 1], strides = [1, 1]} : vector<16x16xf32> to vector<16x1xf32>
    %23 = tpu.concatenate %21, %22 in 1 : vector<16x15xf32>, vector<16x1xf32> -> vector<16x16xf32>
    %24 = vector.extract_strided_slice %19 {offsets = [0, 1], sizes = [16, 1], strides = [1, 1]} : vector<16x16xf32> to vector<16x1xf32>
    %25 = vector.extract_strided_slice %19 {offsets = [0, 0], sizes = [16, 15], strides = [1, 1]} : vector<16x16xf32> to vector<16x15xf32>
    %26 = tpu.concatenate %24, %25 in 1 : vector<16x1xf32>, vector<16x15xf32> -> vector<16x16xf32>
    %27 = arith.subf %23, %26 : vector<16x16xf32>
    %28 = vector.extract_strided_slice %20 {offsets = [0, 1], sizes = [16, 1], strides = [1, 1]} : vector<16x16xf32> to vector<16x1xf32>
    %29 = vector.extract_strided_slice %20 {offsets = [0, 0], sizes = [16, 15], strides = [1, 1]} : vector<16x16xf32> to vector<16x15xf32>
    %30 = tpu.concatenate %28, %29 in 1 : vector<16x1xf32>, vector<16x15xf32> -> vector<16x16xf32>
    %cst_10 = arith.constant 2.000000e+00 : f32
    %31 = vector.broadcast %cst_10 : f32 to vector<16x16xf32>
    %32 = arith.mulf %31, %20 : vector<16x16xf32>
    %33 = arith.addf %30, %32 : vector<16x16xf32>
    %34 = vector.extract_strided_slice %20 {offsets = [0, 1], sizes = [16, 15], strides = [1, 1]} : vector<16x16xf32> to vector<16x15xf32>
    %35 = vector.extract_strided_slice %20 {offsets = [0, 14], sizes = [16, 1], strides = [1, 1]} : vector<16x16xf32> to vector<16x1xf32>
    %36 = tpu.concatenate %34, %35 in 1 : vector<16x15xf32>, vector<16x1xf32> -> vector<16x16xf32>
    %37 = arith.addf %33, %36 : vector<16x16xf32>
    %38 = arith.mulf %27, %27 : vector<16x16xf32>
    %39 = arith.mulf %37, %37 : vector<16x16xf32>
    %40 = arith.addf %38, %39 : vector<16x16xf32>
    %41 = arith.index_cast %arg0 : i32 to index
    %c0_11 = arith.constant 0 : index
    %42 = memref.load %arg3[%41, %c0_11] : memref<2x2xf32, #tpu.memory_space<smem>>
    %43 = arith.index_cast %arg0 : i32 to index
    %c1 = arith.constant 1 : index
    %44 = memref.load %arg3[%43, %c1] : memref<2x2xf32, #tpu.memory_space<smem>>
    %45 = math.sqrt %40 : vector<16x16xf32>
    %46 = vector.broadcast %42 : f32 to vector<16x16xf32>
    %47 = arith.mulf %45, %46 : vector<16x16xf32>
    %48 = vector.broadcast %44 : f32 to vector<16x16xf32>
    %49 = arith.addf %47, %48 : vector<16x16xf32>
    %c0_12 = arith.constant 0 : index
    %c0_13 = arith.constant 0 : index
    %c0_14 = arith.constant 0 : index
    %c0_15 = arith.constant 0 : index
    %50 = vector.load %arg6[%c0_12, %c0_13, %c0_14, %c0_15] : memref<1x1x16x16xf32, #tpu.memory_space<vmem>>, vector<1x1x16x16xf32>
    %51 = vector.shape_cast %50 : vector<1x1x16x16xf32> to vector<16x16xf32>
    %52 = vector.shape_cast %49 : vector<16x16xf32> to vector<1x1x16x16xf32>
    tpu.vector_store %arg6[%c0_12, %c0_13, %c0_14, %c0_15], %52 {strides = array<i32>} : memref<1x1x16x16xf32, #tpu.memory_space<vmem>>, vector<1x1x16x16xf32>,
    return
  }
  func.func @transform_0(%arg0: i32, %arg1: i32, %arg2: i32) -> (i32, i32) {
    %c0_i32 = arith.constant 0 : i32
    %c0_i32_0 = arith.constant 0 : i32
    %c0_i32_1 = arith.constant 0 : i32
    return %c0_i32, %c0_i32_0 : i32, i32
  }
  func.func @transform_1(%arg0: i32, %arg1: i32, %arg2: i32) -> (i32, i32, i32, i32) {
    %c0_i32 = arith.constant 0 : i32
    %c0_i32_0 = arith.constant 0 : i32
    return %arg0, %arg1, %arg2, %c0_i32 : i32, i32, i32, i32
  }
  func.func @transform_2(%arg0: i32, %arg1: i32, %arg2: i32) -> (i32, i32, i32, i32, i32) {
    %c0_i32 = arith.constant 0 : i32
    %c0_i32_0 = arith.constant 0 : i32
    %c0_i32_1 = arith.constant 0 : i32
    return %arg0, %arg1, %arg2, %c0_i32, %c0_i32_0 : i32, i32, i32, i32, i32
  }
  func.func @transform_3(%arg0: i32, %arg1: i32, %arg2: i32) -> (i32, i32, i32, i32) {
    %c0_i32 = arith.constant 0 : i32
    %c0_i32_0 = arith.constant 0 : i32
    return %arg0, %arg1, %arg2, %c0_i32 : i32, i32, i32, i32
  }
}

</mosaic_0001>

<llo_original>
// kernel: sobel_filter_opencv.3
$region0: #{sobel_filter_opencv.3}
  #allocation0 [shape = 'u32[]', space=smem, size = 0x4, offset = 0x4, fixed_abs, tag = 'smem constant byte address 0x4 - core index']
  #allocation1 [shape = 'u32[144,128]{1,0:T(1,128)}', space=vmem, size = 0x12000, scoped, tag = 'internal scratch']
  %s0 = inlined_call_operand.vmem [shape: f32[2,2], index: 0, kind: input, shape index: {}]
  %s1 = inlined_call_operand.vmem [shape: f32[2,4,16,16], index: 1, kind: input, shape index: {}]
  %s2 = inlined_call_operand.vmem [shape: f32[2,4,1,2,16], index: 2, kind: input, shape index: {}]
  %s3 = inlined_call_operand.hbm [shape: f32[2,4,16,16], index: 3, kind: output, shape index: {}]
  %s4 = sld [smem:[#allocation0]]
  $region49: #{sobel_filter_opencv.3} parent=0
    _
  %s6 = ssub.s32 1, %s4
  %s7 = scalar_select 0, %s6, %s4
  $region1: #{sobel_filter_opencv.3} parent=0
    #allocation2 [shape = 'u8[1024]{0}', space=smem, size = 0x400, scoped, tag = 'input window, operand 0, single buffered']
    #allocation3 [shape = 's32[2]{0}', space=sflag, size = 0x8, scoped, tag = 'scoped memory for sobel_filter_opencv.3']
    #allocation4 [shape = 's32[2]{0}', space=sflag, size = 0x8, scoped, tag = 'scoped memory for sobel_filter_opencv.3']
    #allocation5 [shape = 'u8[16384]{0}', space=vmem, size = 0x4000, scoped, tag = 'output window, operand 0']
    %8 = vsyncpa [#allocation4], 0
    %9 = vsyncpa [#allocation3], 0
    %s10 = scalar_lea.sflag [#allocation3], 1
    %11 = vsyncpa %s10, 0
    loop: start=0, step=1, limit=10
    $region2: #{sobel_filter_opencv.3} parent=1 // loop_pre_header
      _
    $region3: #{sobel_filter_opencv.3} parent=1 // loop_header
      %s13 = sphi 0, %s17
      %p14 = scmp.ge.s32.totalorder %s13, 10
      %s20 = sphi 0, %s39
      %s21 = sphi 0, %s35
      %s22 = sphi 0, %s31
      %s23 = sphi 0, %s20
      %s24 = sphi 0, %s21
      %s25 = sphi 0, %s22
      %s26 = sphi 0, %s23
      %s27 = sphi 0, %s24
      %s28 = sphi 0, %s25
      %s40 = sphi 0, %s40
      %s42 = sphi 0, %s40
      %s43 = sphi 0, %s42
      %s57 = sphi 0, %s43
      %s67 = sphi 0, %s69
      %s70 = sphi 0, %s67
      %s71 = sphi 0, %s70
      %s87 = sphi 0, %s71
      %s97 = sphi 0, %s99
      %s100 = sphi 0, %s97
      %s101 = sphi 0, %s100
      %s117 = sphi 0, %s101
      %s127 = sphi 0, %s129
      %s130 = sphi 0, %s127
      %s131 = sphi 0, %s130
      %s147 = sphi 0, %s131
    $region4: #{sobel_filter_opencv.3} parent=1 // loop_header_branch
      %16 = sbr.rel (%p14) target = $region8
    $region5: #{sobel_filter_opencv.3} parent=1 // loop_body
      %s18 = ssub.s32 %s13, 1
      %s19 = ssub.s32 %s13, 2
      %s29 = sadd.s32 1, %s22
      %p30 = scmp.ge.s32.totalorder %s29, 1
      %s31 = scalar_select %p30, 0, %s29
      %s32 = sadd.s32 1, %s21
      %s33 = scalar_select %p30, %s32, %s21
      %p34 = scmp.ge.s32.totalorder %s33, 4
      %s35 = scalar_select %p34, 0, %s33
      %s36 = sadd.s32 1, %s20
      %s37 = scalar_select %p34, %s36, %s20
      %p38 = scmp.ge.s32.totalorder %s37, 2
      %s39 = scalar_select %p38, 0, %s37
      %s41 = sadd.s32 %s40, 1
      %p44 = scmp.eq.s32.totalorder %s13, 7
      %p45 = scmp.ne.s32.totalorder %s40, %s42
      %p46 = scmp.eq.s32.totalorder %s13, 0
      %p47 = por %p45, %p46
      %p48 = scmp.ne.s32.totalorder %s40, %s42
      %p49 = scmp.eq.s32.totalorder %s18, 7
      %p50 = por %p48, %p49
      %p51 = scmp.ne.s32.totalorder %s42, %s43
      %p52 = scmp.eq.s32.totalorder %s18, 0
      %p53 = por %p51, %p52
      %p54 = scmp.ne.s32.totalorder %s42, %s43
      %p55 = scmp.eq.s32.totalorder %s19, 7
      %p56 = por %p54, %p55
      %p58 = scmp.ne.s32.totalorder %s43, %s57
      %p59 = scmp.eq.s32.totalorder %s19, 0
      %p60 = por %p58, %p59
      %s61 = ssub.s32 %s20, %s39
      %s62 = ssub.s32 %s21, %s35
      %s63 = sor.u32 %s61, %s62
      %s64 = ssub.s32 %s22, %s31
      %s65 = sor.u32 %s63, %s64
      %p66 = scmp.eq.s32.totalorder %s65, 0
      %s68 = sadd.s32 %s67, 1
      %s69 = scalar_select %p66, %s67, %s68
      %p72 = pneg %p66
      %p73 = scmp.eq.s32.totalorder %s13, 7
      %p74 = por %p72, %p73
      %p75 = scmp.ne.s32.totalorder %s67, %s70
      %p76 = scmp.eq.s32.totalorder %s13, 0
      %p77 = por %p75, %p76
      %p78 = scmp.ne.s32.totalorder %s67, %s70
      %p79 = scmp.eq.s32.totalorder %s18, 7
      %p80 = por %p78, %p79
      %p81 = scmp.ne.s32.totalorder %s70, %s71
      %p82 = scmp.eq.s32.totalorder %s18, 0
      %p83 = por %p81, %p82
      %p84 = scmp.ne.s32.totalorder %s70, %s71
      %p85 = scmp.eq.s32.totalorder %s19, 7
      %p86 = por %p84, %p85
      %p88 = scmp.ne.s32.totalorder %s71, %s87
      %p89 = scmp.eq.s32.totalorder %s19, 0
      %p90 = por %p88, %p89
      %s91 = ssub.s32 %s20, %s39
      %s92 = ssub.s32 %s21, %s35
      %s93 = sor.u32 %s91, %s92
      %s94 = ssub.s32 %s22, %s31
      %s95 = sor.u32 %s93, %s94
      %p96 = scmp.eq.s32.totalorder %s95, 0
      %s98 = sadd.s32 %s97, 1
      %s99 = scalar_select %p96, %s97, %s98
      %p102 = pneg %p96
      %p103 = scmp.eq.s32.totalorder %s13, 7
      %p104 = por %p102, %p103
      %p105 = scmp.ne.s32.totalorder %s97, %s100
      %p106 = scmp.eq.s32.totalorder %s13, 0
      %p107 = por %p105, %p106
      %p108 = scmp.ne.s32.totalorder %s97, %s100
      %p109 = scmp.eq.s32.totalorder %s18, 7
      %p110 = por %p108, %p109
      %p111 = scmp.ne.s32.totalorder %s100, %s101
      %p112 = scmp.eq.s32.totalorder %s18, 0
      %p113 = por %p111, %p112
      %p114 = scmp.ne.s32.totalorder %s100, %s101
      %p115 = scmp.eq.s32.totalorder %s19, 7
      %p116 = por %p114, %p115
      %p118 = scmp.ne.s32.totalorder %s101, %s117
      %p119 = scmp.eq.s32.totalorder %s19, 0
      %p120 = por %p118, %p119
      %s121 = ssub.s32 %s20, %s39
      %s122 = ssub.s32 %s21, %s35
      %s123 = sor.u32 %s121, %s122
      %s124 = ssub.s32 %s22, %s31
      %s125 = sor.u32 %s123, %s124
      %p126 = scmp.eq.s32.totalorder %s125, 0
      %s128 = sadd.s32 %s127, 1
      %s129 = scalar_select %p126, %s127, %s128
      %p132 = pneg %p126
      %p133 = scmp.eq.s32.totalorder %s13, 7
      %p134 = por %p132, %p133
      %p135 = scmp.ne.s32.totalorder %s127, %s130
      %p136 = scmp.eq.s32.totalorder %s13, 0
      %p137 = por %p135, %p136
      %p138 = scmp.ne.s32.totalorder %s127, %s130
      %p139 = scmp.eq.s32.totalorder %s18, 7
      %p140 = por %p138, %p139
      %p141 = scmp.ne.s32.totalorder %s130, %s131
      %p142 = scmp.eq.s32.totalorder %s18, 0
      %p143 = por %p141, %p142
      %p144 = scmp.ne.s32.totalorder %s130, %s131
      %p145 = scmp.eq.s32.totalorder %s19, 7
      %p146 = por %p144, %p145
      %p148 = scmp.ne.s32.totalorder %s131, %s147
      %p149 = scmp.eq.s32.totalorder %s19, 0
      %p150 = por %p148, %p149
      %p151 = scmp.le.s32.totalorder 1, %s13
      %p152 = scmp.lt.s32.totalorder %s13, 9
      %p153 = pnand %p151, %p152
      %p154 = pneg %p153
      // Predicated region
      $region9: #{sobel_filter_opencv.3} parent=5 // pred_check
        _
      $region10: #{sobel_filter_opencv.3} parent=5 // pred_check_branch
        %156 = sbr.rel (%p153) target = $region12
      $region11: #{sobel_filter_opencv.3} parent=5 // pred_region
        %s157 = ssub.s32 %s13, 1
        // Predicated region
        $region13: #{sobel_filter_opencv.3} parent=11 // pred_check
          %p158 = pneg %p53
        $region14: #{sobel_filter_opencv.3} parent=11 // pred_check_branch
          %160 = sbr.rel (%p158) target = $region16
        $region15: #{sobel_filter_opencv.3} parent=11 // pred_region
          %s162 = ssub.s32 32, 32
          %163 = vsyncadd [#allocation4], %s162
          %s165 = sshll.u32 %s0, 4
          %s166 = int_to_ptr.vmem [resolvable:$true] %s165
          %168 = dma.vmem_to_smem %s166, 32, [#allocation2], [#allocation4]
        $region16: #{sobel_filter_opencv.3} parent=11 // pred_fallthru
          _
      $region12: #{sobel_filter_opencv.3} parent=5 // pred_fallthru
        _
      %p169 = scmp.lt.s32.totalorder %s13, 8
      // Predicated region
      $region17: #{sobel_filter_opencv.3} parent=5 // pred_check
        %p170 = pneg %p169
      $region18: #{sobel_filter_opencv.3} parent=5 // pred_check_branch
        %172 = sbr.rel (%p170) target = $region20
      $region19: #{sobel_filter_opencv.3} parent=5 // pred_region
        // Predicated region
        $region21: #{sobel_filter_opencv.3} parent=19 // pred_check
          %p173 = pneg %p77
        $region22: #{sobel_filter_opencv.3} parent=19 // pred_check_branch
          %175 = sbr.rel (%p173) target = $region24
        $region23: #{sobel_filter_opencv.3} parent=19 // pred_region
          %s176 = smul.u32 2, %s22
          %p177 = scmp.lt.s32.totalorder %s20, 1
          %s178 = scalar_select %p177, %s20, 1
          %p179 = scmp.lt.s32.totalorder %s21, 3
          %s180 = scalar_select %p179, %s21, 3
          %p181 = scmp.lt.s32.totalorder %s176, 1
          %s182 = scalar_select %p181, %s176, 1
          %s183 = smul.addr %s180, 2
          %s184 = sadd.s32 %s182, %s183
          %s185 = smul.addr %s178, 8
          %s186 = sadd.s32 %s184, %s185
          %s187 = smul.addr %s186, 8
          %s188 = scalar_lea.vmem %s1, %s187
          %s189 = smul.u32 2, %s22
        $region24: #{sobel_filter_opencv.3} parent=19 // pred_fallthru
          _
        // Predicated region
        $region25: #{sobel_filter_opencv.3} parent=19 // pred_check
          %p190 = pneg %p107
        $region26: #{sobel_filter_opencv.3} parent=19 // pred_check_branch
          %192 = sbr.rel (%p190) target = $region28
        $region27: #{sobel_filter_opencv.3} parent=19 // pred_region
          %p193 = scmp.lt.s32.totalorder %s20, 1
          %s194 = scalar_select %p193, %s20, 1
          %p195 = scmp.lt.s32.totalorder %s21, 3
          %s196 = scalar_select %p195, %s21, 3
          %p197 = scmp.lt.s32.totalorder %s22, 0
          %s198 = scalar_select %p197, %s22, 0
          %s199 = sadd.s32 %s198, %s196
          %s200 = smul.addr %s194, 4
          %s201 = sadd.s32 %s199, %s200
          %s202 = smul.addr %s201, 2
          %s203 = scalar_lea.vmem %s2, %s202
        $region28: #{sobel_filter_opencv.3} parent=19 // pred_fallthru
          _
      $region20: #{sobel_filter_opencv.3} parent=5 // pred_fallthru
        _
      %p204 = scmp.le.s32.totalorder 1, %s13
      %p205 = scmp.lt.s32.totalorder %s13, 9
      %p206 = pnand %p204, %p205
      %p207 = pneg %p206
      // Predicated region
      $region29: #{sobel_filter_opencv.3} parent=5 // pred_check
        _
      $region30: #{sobel_filter_opencv.3} parent=5 // pred_check_branch
        %209 = sbr.rel (%p206) target = $region32
      $region31: #{sobel_filter_opencv.3} parent=5 // pred_region
        %s210 = ssub.s32 %s13, 1
        // Predicated region
        $region33: #{sobel_filter_opencv.3} parent=31 // pred_check
          %p211 = pneg %p53
        $region34: #{sobel_filter_opencv.3} parent=31 // pred_check_branch
          %213 = sbr.rel (%p211) target = $region36
        $region35: #{sobel_filter_opencv.3} parent=31 // pred_region
          %214 = dma.done [#allocation4], 32
        $region36: #{sobel_filter_opencv.3} parent=31 // pred_fallthru
          _
        %215 = sfence
        %p216 = pneg %p53
        %p217 = pneg %p50
        %s218 = smul.u32 2, %s25
        %p219 = scmp.lt.s32.totalorder %s23, 1
        %s220 = scalar_select %p219, %s23, 1
        %p221 = scmp.lt.s32.totalorder %s24, 3
        %s222 = scalar_select %p221, %s24, 3
        %p223 = scmp.lt.s32.totalorder %s218, 1
        %s224 = scalar_select %p223, %s218, 1
        %s225 = smul.addr %s222, 2
        %s226 = sadd.s32 %s224, %s225
        %s227 = smul.addr %s220, 8
        %s228 = sadd.s32 %s226, %s227
        %s229 = smul.addr %s228, 8
        %s230 = scalar_lea.vmem %s1, %s229
        %p231 = pneg %p83
        %p232 = pneg %p80
        %p233 = scmp.lt.s32.totalorder %s23, 1
        %s234 = scalar_select %p233, %s23, 1
        %p235 = scmp.lt.s32.totalorder %s24, 3
        %s236 = scalar_select %p235, %s24, 3
        %p237 = scmp.lt.s32.totalorder %s25, 0
        %s238 = scalar_select %p237, %s25, 0
        %s239 = sadd.s32 %s238, %s236
        %s240 = smul.addr %s234, 4
        %s241 = sadd.s32 %s239, %s240
        %s242 = smul.addr %s241, 2
        %s243 = scalar_lea.vmem %s2, %s242
        %p244 = pneg %p113
        %p245 = pneg %p110
        %p246 = pneg %p143
        %p247 = pneg %p140
        %s248 = sand.u32 %s130, 1
        %s249 = scalar_lea.sflag [#allocation3], %s248
        %s250 = sand.u32 %s130, 1
        %s251 = smul.addr %s250, 16
        %s252 = scalar_lea.vmem [#allocation5], %s251
        %s253 = smul.u32 2, %s25
        %p254 = scmp.lt.s32.totalorder %s23, 1
        %s255 = scalar_select %p254, %s23, 1
        %p256 = scmp.lt.s32.totalorder %s24, 3
        %s257 = scalar_select %p256, %s24, 3
        %p258 = scmp.lt.s32.totalorder %s253, 1
        %s259 = scalar_select %p258, %s253, 1
        %s260 = smul.addr %s257, 2
        %s261 = sadd.s32 %s259, %s260
        %s262 = smul.addr %s255, 8
        %s263 = sadd.s32 %s261, %s262
        %s264 = smul.addr %s263, 8
        %s265 = scalar_lea.vmem %s1, %s264
        %s266 = smul.u32 2, %s25
        %p267 = scmp.lt.s32.totalorder %s23, 1
        %s268 = scalar_select %p267, %s23, 1
        %p269 = scmp.lt.s32.totalorder %s24, 3
        %s270 = scalar_select %p269, %s24, 3
        %p271 = scmp.lt.s32.totalorder %s25, 0
        %s272 = scalar_select %p271, %s25, 0
        %s273 = sadd.s32 %s272, %s270
        %s274 = smul.addr %s268, 4
        %s275 = sadd.s32 %s273, %s274
        %s276 = smul.addr %s275, 2
        %s277 = scalar_lea.vmem %s2, %s276
        %s278 = smul.u32 2, %s25
        %v279 = vld [vmem:[%s265] sm:$0xff]
        %v280 = vld [vmem:[%s265 + $0x8] sm:$0xff]
        %v281 = vmul.f32 %v279, 255.0
        %v282 = vmul.f32 %v280, 255.0
        %v283 = vfloor.f32 %v281
        %v284 = vfloor.f32 %v282
        %v285 = vld [vmem:[%s277] sm:$0x3]
        %v286 = vmul.f32 %v285, 255.0
        %v287 = vfloor.f32 %v286
        %vm290 = vcmask 1040384
        %v291 = vrot.slane %v283, 7
        %v292 = vrot.slane %v284, 7
        %v293 = vsel %vm290, %v291, %v292
        %v296 = vsel %vm290, %v287, %v291
        %vm297 = vcmask 1046528
        %v298 = vrot.slane %v283, 1
        %v299 = vrot.slane %v284, 1
        %v300 = vsel %vm297, %v298, %v299
        %v304 = vrot.slane %v287, 2
        %v306 = vsel %vm297, %v299, %v304
        %v307 = vmul.f32 %v283, 2.0
        %v308 = vmul.f32 %v284, 2.0
        %v309 = vadd.f32 %v296, %v307
        %v310 = vadd.f32 %v293, %v308
        %v311 = vadd.f32 %v309, %v300
        %v312 = vadd.f32 %v310, %v306
        %v313 = vsub.f32 %v300, %v296
        %v314 = vsub.f32 %v306, %v293
        %317 = vrot.lane.b32.xlu0 %v311, 127
        %v318 = vpop.permute.xlu0 %317
        %319 = vrot.lane.b32.xlu0 %v312, 127
        %v320 = vpop.permute.xlu0 %319
        %323 = vrot.lane.b32.xlu0 %v311, 1
        %v324 = vpop.permute.xlu0 %323
        %325 = vrot.lane.b32.xlu0 %v312, 1
        %v326 = vpop.permute.xlu0 %325
        %vm329 = vcmask 121856
        %v330 = vsel %vm329, %v318, %v324
        %v331 = vsel %vm329, %v320, %v326
        %vm332 = vcmask 7168
        %v333 = vsel %vm332, %v318, %v324
        %v334 = vsel %vm332, %v320, %v326
        %v335 = vsub.f32 %v330, %v333
        %v336 = vsub.f32 %v331, %v334
        %339 = vrot.lane.b32.xlu0 %v313, 127
        %v340 = vpop.permute.xlu0 %339
        %341 = vrot.lane.b32.xlu0 %v314, 127
        %v342 = vpop.permute.xlu0 %341
        %345 = vrot.lane.b32.xlu0 %v313, 1
        %v346 = vpop.permute.xlu0 %345
        %347 = vrot.lane.b32.xlu0 %v314, 1
        %v348 = vpop.permute.xlu0 %347
        %v351 = vsel %vm332, %v340, %v346
        %v352 = vsel %vm332, %v342, %v348
        %v353 = vmul.f32 %v313, 2.0
        %v354 = vmul.f32 %v314, 2.0
        %v355 = vadd.f32 %v351, %v353
        %v356 = vadd.f32 %v352, %v354
        %v357 = vsel %vm329, %v340, %v346
        %v358 = vsel %vm329, %v342, %v348
        %v359 = vadd.f32 %v355, %v357
        %v360 = vadd.f32 %v356, %v358
        %v361 = vmul.f32 %v335, %v335
        %v362 = vmul.f32 %v336, %v336
        %v363 = vmul.f32 %v359, %v359
        %v364 = vmul.f32 %v360, %v360
        %v365 = vadd.f32 %v361, %v363
        %v366 = vadd.f32 %v362, %v364
        %s367 = smul.u32 %s23, 128
        %s368 = sld [smem:[#allocation2 + %s367]]
        %s369 = sadd.s32 %s367, 1
        %s370 = sld [smem:[#allocation2 + %s369]]
        %v371 = vrsqrt.pop %v365
        %v372 = vmul.f32 %v365, %v371
        %vm373 = vcmp.eq.f32.partialorder %v365, inf
        %v374 = vsel %vm373, %v365, %v372
        %vm375 = vcmp.eq.f32.partialorder %v365, 0.0
        %v376 = vand.u32 %v365, 2147483648
        %v377 = vsel %vm375, %v376, %v374
        %v378 = vrsqrt.pop %v366
        %v379 = vmul.f32 %v366, %v378
        %vm380 = vcmp.eq.f32.partialorder %v366, inf
        %v381 = vsel %vm380, %v366, %v379
        %vm382 = vcmp.eq.f32.partialorder %v366, 0.0
        %v383 = vand.u32 %v366, 2147483648
        %v384 = vsel %vm382, %v383, %v381
        %v385 = vstv %s368
        %v386 = vmul.f32 %v377, %v385
        %v387 = vmul.f32 %v384, %v385
        %v388 = vstv %s370
        %v389 = vadd.f32 %v386, %v388
        %v390 = vadd.f32 %v387, %v388
        %vm391 = vcmask 130048
        %392 = vst.msk [vmem:[%s252] sm:$0xff] %vm391, %v389
        %393 = vst.msk [vmem:[%s252 + $0x8] sm:$0xff] %vm391, %v390
        %s394 = sand.u32 %s130, 1
        %s395 = scalar_lea.sflag [#allocation3], %s394
        %s396 = sand.u32 %s130, 1
        %s397 = smul.addr %s396, 16
        %s398 = scalar_lea.vmem [#allocation5], %s397
        // Predicated region
        $region37: #{sobel_filter_opencv.3} parent=31 // pred_check
          %p399 = pneg %p140
        $region38: #{sobel_filter_opencv.3} parent=31 // pred_check_branch
          %401 = sbr.rel (%p399) target = $region40
        $region39: #{sobel_filter_opencv.3} parent=31 // pred_region
          %s402 = smul.u32 2, %s25
          %s404 = ssub.s32 256, 256
          %405 = vsyncadd %s395, %s404
          %s406 = smul.addr %s24, 2
          %s407 = sadd.s32 %s402, %s406
          %s408 = smul.addr %s23, 8
          %s409 = sadd.s32 %s407, %s408
          %s410 = smul.addr %s409, 128
          %s411 = scalar_lea.hbm %s3, %s410
          %s412 = sshll.u32 %s398, 4
          %s413 = int_to_ptr.vmem [resolvable:$true] %s412
          %418 = dma.vmem_to_hbm [thread:$0]  %s413, 256, %s411, %s395, 128, 128, 8
        $region40: #{sobel_filter_opencv.3} parent=31 // pred_fallthru
          _
      $region32: #{sobel_filter_opencv.3} parent=5 // pred_fallthru
        _
      %p419 = scmp.le.s32.totalorder 2, %s13
      // Predicated region
      $region41: #{sobel_filter_opencv.3} parent=5 // pred_check
        %p420 = pneg %p419
      $region42: #{sobel_filter_opencv.3} parent=5 // pred_check_branch
        %422 = sbr.rel (%p420) target = $region44
      $region43: #{sobel_filter_opencv.3} parent=5 // pred_region
        %s423 = ssub.s32 %s13, 2
        // Predicated region
        $region45: #{sobel_filter_opencv.3} parent=43 // pred_check
          %p424 = pneg %p146
        $region46: #{sobel_filter_opencv.3} parent=43 // pred_check_branch
          %426 = sbr.rel (%p424) target = $region48
        $region47: #{sobel_filter_opencv.3} parent=43 // pred_region
          %s427 = sand.u32 %s131, 1
          %s428 = scalar_lea.sflag [#allocation3], %s427
          %s429 = sand.u32 %s131, 1
          %s430 = smul.addr %s429, 16
          %s431 = scalar_lea.vmem [#allocation5], %s430
          %432 = dma.done %s428, 256
        $region48: #{sobel_filter_opencv.3} parent=43 // pred_fallthru
          _
      $region44: #{sobel_filter_opencv.3} parent=5 // pred_fallthru
        _
    $region6: #{sobel_filter_opencv.3} parent=1 // loop_footer
      %s17 = sadd.s32 1, %s13
    $region7: #{sobel_filter_opencv.3} parent=1 // loop_footer_branch
      %12 = sbr.rel target = $region3
    $region8: #{sobel_filter_opencv.3} parent=1 // loop_exit
      _
    %433 = vsyncpa [#allocation3], 1
    %s434 = scalar_lea.sflag [#allocation3], 1
    %435 = vsyncpa %s434, 1
    %436 = vsyncpa [#allocation4], 1
    %s437 = scalar_lea.sflag [#allocation4], 1
    %438 = vsyncpa %s437, 1

// kernel: sobel_filter_opencv.2
$region0: #{sobel_filter_opencv.2}
  #allocation0 [shape = 'u32[]', space=smem, size = 0x4, offset = 0x4, fixed_abs, tag = 'smem constant byte address 0x4 - core index']
  #allocation1 [shape = 'u32[144,128]{1,0:T(1,128)}', space=vmem, size = 0x12000, scoped, tag = 'internal scratch']
  %s0 = inlined_call_operand.vmem [shape: f32[2,4,16,16], index: 0, kind: input, shape index: {}]
  %s1 = inlined_call_operand.vmem [shape: f32[2,4,1,2,16], index: 1, kind: input, shape index: {}]
  %s2 = inlined_call_operand.vmem [shape: f32[2,4,1,8,128], index: 2, kind: output, shape index: {0}]
  %s3 = inlined_call_operand.vmem [shape: f32[2,4,1,8,128], index: 3, kind: output, shape index: {1}]
  %4 = xla_tuple %s2, %s3
  %s5 = sld [smem:[#allocation0]]
  $region49: #{sobel_filter_opencv.2} parent=0
    _
  %s7 = ssub.s32 1, %s5
  %s8 = scalar_select 0, %s7, %s5
  loop: start=0, step=1, limit=10
  $region2: #{sobel_filter_opencv.2} parent=0 // loop_pre_header
    _
  $region3: #{sobel_filter_opencv.2} parent=0 // loop_header
    %s10 = sphi 0, %s14
    %p11 = scmp.ge.s32.totalorder %s10, 10
    %s17 = sphi 0, %s36
    %s18 = sphi 0, %s32
    %s19 = sphi 0, %s28
    %s20 = sphi 0, %s17
    %s21 = sphi 0, %s18
    %s22 = sphi 0, %s19
    %s23 = sphi 0, %s20
    %s24 = sphi 0, %s21
    %s25 = sphi 0, %s22
    %s43 = sphi 0, %s45
    %s46 = sphi 0, %s43
    %s47 = sphi 0, %s46
    %s63 = sphi 0, %s47
    %s73 = sphi 0, %s75
    %s76 = sphi 0, %s73
    %s77 = sphi 0, %s76
    %s93 = sphi 0, %s77
    %s103 = sphi 0, %s105
    %s106 = sphi 0, %s103
    %s107 = sphi 0, %s106
    %s123 = sphi 0, %s107
    %s133 = sphi 0, %s135
    %s136 = sphi 0, %s133
    %s137 = sphi 0, %s136
    %s153 = sphi 0, %s137
  $region4: #{sobel_filter_opencv.2} parent=0 // loop_header_branch
    %13 = sbr.rel (%p11) target = $region8
  $region5: #{sobel_filter_opencv.2} parent=0 // loop_body
    %s15 = ssub.s32 %s10, 1
    %s16 = ssub.s32 %s10, 2
    %s26 = sadd.s32 1, %s19
    %p27 = scmp.ge.s32.totalorder %s26, 1
    %s28 = scalar_select %p27, 0, %s26
    %s29 = sadd.s32 1, %s18
    %s30 = scalar_select %p27, %s29, %s18
    %p31 = scmp.ge.s32.totalorder %s30, 4
    %s32 = scalar_select %p31, 0, %s30
    %s33 = sadd.s32 1, %s17
    %s34 = scalar_select %p31, %s33, %s17
    %p35 = scmp.ge.s32.totalorder %s34, 2
    %s36 = scalar_select %p35, 0, %s34
    %s37 = ssub.s32 %s17, %s36
    %s38 = ssub.s32 %s18, %s32
    %s39 = sor.u32 %s37, %s38
    %s40 = ssub.s32 %s19, %s28
    %s41 = sor.u32 %s39, %s40
    %p42 = scmp.eq.s32.totalorder %s41, 0
    %s44 = sadd.s32 %s43, 1
    %s45 = scalar_select %p42, %s43, %s44
    %p48 = pneg %p42
    %p49 = scmp.eq.s32.totalorder %s10, 7
    %p50 = por %p48, %p49
    %p51 = scmp.ne.s32.totalorder %s43, %s46
    %p52 = scmp.eq.s32.totalorder %s10, 0
    %p53 = por %p51, %p52
    %p54 = scmp.ne.s32.totalorder %s43, %s46
    %p55 = scmp.eq.s32.totalorder %s15, 7
    %p56 = por %p54, %p55
    %p57 = scmp.ne.s32.totalorder %s46, %s47
    %p58 = scmp.eq.s32.totalorder %s15, 0
    %p59 = por %p57, %p58
    %p60 = scmp.ne.s32.totalorder %s46, %s47
    %p61 = scmp.eq.s32.totalorder %s16, 7
    %p62 = por %p60, %p61
    %p64 = scmp.ne.s32.totalorder %s47, %s63
    %p65 = scmp.eq.s32.totalorder %s16, 0
    %p66 = por %p64, %p65
    %s67 = ssub.s32 %s17, %s36
    %s68 = ssub.s32 %s18, %s32
    %s69 = sor.u32 %s67, %s68
    %s70 = ssub.s32 %s19, %s28
    %s71 = sor.u32 %s69, %s70
    %p72 = scmp.eq.s32.totalorder %s71, 0
    %s74 = sadd.s32 %s73, 1
    %s75 = scalar_select %p72, %s73, %s74
    %p78 = pneg %p72
    %p79 = scmp.eq.s32.totalorder %s10, 7
    %p80 = por %p78, %p79
    %p81 = scmp.ne.s32.totalorder %s73, %s76
    %p82 = scmp.eq.s32.totalorder %s10, 0
    %p83 = por %p81, %p82
    %p84 = scmp.ne.s32.totalorder %s73, %s76
    %p85 = scmp.eq.s32.totalorder %s15, 7
    %p86 = por %p84, %p85
    %p87 = scmp.ne.s32.totalorder %s76, %s77
    %p88 = scmp.eq.s32.totalorder %s15, 0
    %p89 = por %p87, %p88
    %p90 = scmp.ne.s32.totalorder %s76, %s77
    %p91 = scmp.eq.s32.totalorder %s16, 7
    %p92 = por %p90, %p91
    %p94 = scmp.ne.s32.totalorder %s77, %s93
    %p95 = scmp.eq.s32.totalorder %s16, 0
    %p96 = por %p94, %p95
    %s97 = ssub.s32 %s17, %s36
    %s98 = ssub.s32 %s18, %s32
    %s99 = sor.u32 %s97, %s98
    %s100 = ssub.s32 %s19, %s28
    %s101 = sor.u32 %s99, %s100
    %p102 = scmp.eq.s32.totalorder %s101, 0
    %s104 = sadd.s32 %s103, 1
    %s105 = scalar_select %p102, %s103, %s104
    %p108 = pneg %p102
    %p109 = scmp.eq.s32.totalorder %s10, 7
    %p110 = por %p108, %p109
    %p111 = scmp.ne.s32.totalorder %s103, %s106
    %p112 = scmp.eq.s32.totalorder %s10, 0
    %p113 = por %p111, %p112
    %p114 = scmp.ne.s32.totalorder %s103, %s106
    %p115 = scmp.eq.s32.totalorder %s15, 7
    %p116 = por %p114, %p115
    %p117 = scmp.ne.s32.totalorder %s106, %s107
    %p118 = scmp.eq.s32.totalorder %s15, 0
    %p119 = por %p117, %p118
    %p120 = scmp.ne.s32.totalorder %s106, %s107
    %p121 = scmp.eq.s32.totalorder %s16, 7
    %p122 = por %p120, %p121
    %p124 = scmp.ne.s32.totalorder %s107, %s123
    %p125 = scmp.eq.s32.totalorder %s16, 0
    %p126 = por %p124, %p125
    %s127 = ssub.s32 %s17, %s36
    %s128 = ssub.s32 %s18, %s32
    %s129 = sor.u32 %s127, %s128
    %s130 = ssub.s32 %s19, %s28
    %s131 = sor.u32 %s129, %s130
    %p132 = scmp.eq.s32.totalorder %s131, 0
    %s134 = sadd.s32 %s133, 1
    %s135 = scalar_select %p132, %s133, %s134
    %p138 = pneg %p132
    %p139 = scmp.eq.s32.totalorder %s10, 7
    %p140 = por %p138, %p139
    %p141 = scmp.ne.s32.totalorder %s133, %s136
    %p142 = scmp.eq.s32.totalorder %s10, 0
    %p143 = por %p141, %p142
    %p144 = scmp.ne.s32.totalorder %s133, %s136
    %p145 = scmp.eq.s32.totalorder %s15, 7
    %p146 = por %p144, %p145
    %p147 = scmp.ne.s32.totalorder %s136, %s137
    %p148 = scmp.eq.s32.totalorder %s15, 0
    %p149 = por %p147, %p148
    %p150 = scmp.ne.s32.totalorder %s136, %s137
    %p151 = scmp.eq.s32.totalorder %s16, 7
    %p152 = por %p150, %p151
    %p154 = scmp.ne.s32.totalorder %s137, %s153
    %p155 = scmp.eq.s32.totalorder %s16, 0
    %p156 = por %p154, %p155
    %p157 = scmp.le.s32.totalorder 1, %s10
    %p158 = scmp.lt.s32.totalorder %s10, 9
    %p159 = pnand %p157, %p158
    %p160 = pneg %p159
    // Predicated region
    $region9: #{sobel_filter_opencv.2} parent=5 // pred_check
      _
    $region10: #{sobel_filter_opencv.2} parent=5 // pred_check_branch
      %162 = sbr.rel (%p159) target = $region12
    $region11: #{sobel_filter_opencv.2} parent=5 // pred_region
      %s163 = ssub.s32 %s10, 1
    $region12: #{sobel_filter_opencv.2} parent=5 // pred_fallthru
      _
    %p164 = scmp.lt.s32.totalorder %s10, 8
    // Predicated region
    $region13: #{sobel_filter_opencv.2} parent=5 // pred_check
      %p165 = pneg %p164
    $region14: #{sobel_filter_opencv.2} parent=5 // pred_check_branch
      %167 = sbr.rel (%p165) target = $region16
    $region15: #{sobel_filter_opencv.2} parent=5 // pred_region
      // Predicated region
      $region17: #{sobel_filter_opencv.2} parent=15 // pred_check
        %p168 = pneg %p53
      $region18: #{sobel_filter_opencv.2} parent=15 // pred_check_branch
        %170 = sbr.rel (%p168) target = $region20
      $region19: #{sobel_filter_opencv.2} parent=15 // pred_region
        %s171 = smul.u32 2, %s19
        %p172 = scmp.lt.s32.totalorder %s17, 1
        %s173 = scalar_select %p172, %s17, 1
        %p174 = scmp.lt.s32.totalorder %s18, 3
        %s175 = scalar_select %p174, %s18, 3
        %p176 = scmp.lt.s32.totalorder %s171, 1
        %s177 = scalar_select %p176, %s171, 1
        %s178 = smul.addr %s175, 2
        %s179 = sadd.s32 %s177, %s178
        %s180 = smul.addr %s173, 8
        %s181 = sadd.s32 %s179, %s180
        %s182 = smul.addr %s181, 8
        %s183 = scalar_lea.vmem %s0, %s182
        %s184 = smul.u32 2, %s19
      $region20: #{sobel_filter_opencv.2} parent=15 // pred_fallthru
        _
      // Predicated region
      $region21: #{sobel_filter_opencv.2} parent=15 // pred_check
        %p185 = pneg %p83
      $region22: #{sobel_filter_opencv.2} parent=15 // pred_check_branch
        %187 = sbr.rel (%p185) target = $region24
      $region23: #{sobel_filter_opencv.2} parent=15 // pred_region
        %p188 = scmp.lt.s32.totalorder %s17, 1
        %s189 = scalar_select %p188, %s17, 1
        %p190 = scmp.lt.s32.totalorder %s18, 3
        %s191 = scalar_select %p190, %s18, 3
        %p192 = scmp.lt.s32.totalorder %s19, 0
        %s193 = scalar_select %p192, %s19, 0
        %s194 = sadd.s32 %s193, %s191
        %s195 = smul.addr %s189, 4
        %s196 = sadd.s32 %s194, %s195
        %s197 = smul.addr %s196, 2
        %s198 = scalar_lea.vmem %s1, %s197
      $region24: #{sobel_filter_opencv.2} parent=15 // pred_fallthru
        _
    $region16: #{sobel_filter_opencv.2} parent=5 // pred_fallthru
      _
    %p199 = scmp.le.s32.totalorder 1, %s10
    %p200 = scmp.lt.s32.totalorder %s10, 9
    %p201 = pnand %p199, %p200
    %p202 = pneg %p201
    // Predicated region
    $region25: #{sobel_filter_opencv.2} parent=5 // pred_check
      _
    $region26: #{sobel_filter_opencv.2} parent=5 // pred_check_branch
      %204 = sbr.rel (%p201) target = $region28
    $region27: #{sobel_filter_opencv.2} parent=5 // pred_region
      %s205 = ssub.s32 %s10, 1
      %s206 = smul.u32 2, %s22
      %p207 = scmp.lt.s32.totalorder %s20, 1
      %s208 = scalar_select %p207, %s20, 1
      %p209 = scmp.lt.s32.totalorder %s21, 3
      %s210 = scalar_select %p209, %s21, 3
      %p211 = scmp.lt.s32.totalorder %s206, 1
      %s212 = scalar_select %p211, %s206, 1
      %s213 = smul.addr %s210, 2
      %s214 = sadd.s32 %s212, %s213
      %s215 = smul.addr %s208, 8
      %s216 = sadd.s32 %s214, %s215
      %s217 = smul.addr %s216, 8
      %s218 = scalar_lea.vmem %s0, %s217
      %p219 = pneg %p59
      %p220 = pneg %p56
      %p221 = scmp.lt.s32.totalorder %s20, 1
      %s222 = scalar_select %p221, %s20, 1
      %p223 = scmp.lt.s32.totalorder %s21, 3
      %s224 = scalar_select %p223, %s21, 3
      %p225 = scmp.lt.s32.totalorder %s22, 0
      %s226 = scalar_select %p225, %s22, 0
      %s227 = sadd.s32 %s226, %s224
      %s228 = smul.addr %s222, 4
      %s229 = sadd.s32 %s227, %s228
      %s230 = smul.addr %s229, 2
      %s231 = scalar_lea.vmem %s1, %s230
      %p232 = pneg %p89
      %p233 = pneg %p86
      %p234 = pneg %p119
      %p235 = pneg %p116
      %p236 = scmp.lt.s32.totalorder %s20, 1
      %s237 = scalar_select %p236, %s20, 1
      %p238 = scmp.lt.s32.totalorder %s21, 3
      %s239 = scalar_select %p238, %s21, 3
      %p240 = scmp.lt.s32.totalorder %s22, 0
      %s241 = scalar_select %p240, %s22, 0
      %s242 = sadd.s32 %s241, %s239
      %s243 = smul.addr %s237, 4
      %s244 = sadd.s32 %s242, %s243
      %s245 = smul.addr %s244, 8
      %s246 = scalar_lea.vmem %s2, %s245
      %p247 = pneg %p149
      %p248 = pneg %p146
      %p249 = scmp.lt.s32.totalorder %s20, 1
      %s250 = scalar_select %p249, %s20, 1
      %p251 = scmp.lt.s32.totalorder %s21, 3
      %s252 = scalar_select %p251, %s21, 3
      %p253 = scmp.lt.s32.totalorder %s22, 0
      %s254 = scalar_select %p253, %s22, 0
      %s255 = sadd.s32 %s254, %s252
      %s256 = smul.addr %s250, 4
      %s257 = sadd.s32 %s255, %s256
      %s258 = smul.addr %s257, 8
      %s259 = scalar_lea.vmem %s3, %s258
      %s260 = smul.u32 2, %s22
      %p261 = scmp.lt.s32.totalorder %s20, 1
      %s262 = scalar_select %p261, %s20, 1
      %p263 = scmp.lt.s32.totalorder %s21, 3
      %s264 = scalar_select %p263, %s21, 3
      %p265 = scmp.lt.s32.totalorder %s260, 1
      %s266 = scalar_select %p265, %s260, 1
      %s267 = smul.addr %s264, 2
      %s268 = sadd.s32 %s266, %s267
      %s269 = smul.addr %s262, 8
      %s270 = sadd.s32 %s268, %s269
      %s271 = smul.addr %s270, 8
      %s272 = scalar_lea.vmem %s0, %s271
      %s273 = smul.u32 2, %s22
      %p274 = scmp.lt.s32.totalorder %s20, 1
      %s275 = scalar_select %p274, %s20, 1
      %p276 = scmp.lt.s32.totalorder %s21, 3
      %s277 = scalar_select %p276, %s21, 3
      %p278 = scmp.lt.s32.totalorder %s22, 0
      %s279 = scalar_select %p278, %s22, 0
      %s280 = sadd.s32 %s279, %s277
      %s281 = smul.addr %s275, 4
      %s282 = sadd.s32 %s280, %s281
      %s283 = smul.addr %s282, 2
      %s284 = scalar_lea.vmem %s1, %s283
      %p285 = scmp.lt.s32.totalorder %s20, 1
      %s286 = scalar_select %p285, %s20, 1
      %p287 = scmp.lt.s32.totalorder %s21, 3
      %s288 = scalar_select %p287, %s21, 3
      %p289 = scmp.lt.s32.totalorder %s22, 0
      %s290 = scalar_select %p289, %s22, 0
      %s291 = sadd.s32 %s290, %s288
      %s292 = smul.addr %s286, 4
      %s293 = sadd.s32 %s291, %s292
      %s294 = smul.addr %s293, 8
      %s295 = scalar_lea.vmem %s2, %s294
      %p296 = scmp.lt.s32.totalorder %s20, 1
      %s297 = scalar_select %p296, %s20, 1
      %p298 = scmp.lt.s32.totalorder %s21, 3
      %s299 = scalar_select %p298, %s21, 3
      %p300 = scmp.lt.s32.totalorder %s22, 0
      %s301 = scalar_select %p300, %s22, 0
      %s302 = sadd.s32 %s301, %s299
      %s303 = smul.addr %s297, 4
      %s304 = sadd.s32 %s302, %s303
      %s305 = smul.addr %s304, 8
      %s306 = scalar_lea.vmem %s3, %s305
      %v307 = vld [vmem:[%s272] sm:$0xff]
      %v308 = vld [vmem:[%s272 + $0x8] sm:$0xff]
      %v309 = vmul.f32 %v307, 255.0
      %v310 = vmul.f32 %v308, 255.0
      %v311 = vfloor.f32 %v309
      %v312 = vfloor.f32 %v310
      %v313 = vld [vmem:[%s284] sm:$0x3]
      %v314 = vmul.f32 %v313, 255.0
      %v315 = vfloor.f32 %v314
      %vm318 = vcmask 1040384
      %v319 = vrot.slane %v311, 7
      %v320 = vrot.slane %v312, 7
      %v321 = vsel %vm318, %v319, %v320
      %v324 = vsel %vm318, %v315, %v319
      %vm325 = vcmask 1046528
      %v326 = vrot.slane %v311, 1
      %v327 = vrot.slane %v312, 1
      %v328 = vsel %vm325, %v326, %v327
      %v332 = vrot.slane %v315, 2
      %v334 = vsel %vm325, %v327, %v332
      %v335 = vmul.f32 %v311, 2.0
      %v336 = vmul.f32 %v312, 2.0
      %v337 = vadd.f32 %v324, %v335
      %v338 = vadd.f32 %v321, %v336
      %v339 = vadd.f32 %v337, %v328
      %v340 = vadd.f32 %v338, %v334
      %v341 = vsub.f32 %v328, %v324
      %v342 = vsub.f32 %v334, %v321
      %345 = vrot.lane.b32.xlu0 %v339, 127
      %v346 = vpop.permute.xlu0 %345
      %347 = vrot.lane.b32.xlu0 %v340, 127
      %v348 = vpop.permute.xlu0 %347
      %351 = vrot.lane.b32.xlu0 %v339, 1
      %v352 = vpop.permute.xlu0 %351
      %353 = vrot.lane.b32.xlu0 %v340, 1
      %v354 = vpop.permute.xlu0 %353
      %vm357 = vcmask 121856
      %v358 = vsel %vm357, %v346, %v352
      %v359 = vsel %vm357, %v348, %v354
      %vm360 = vcmask 7168
      %v361 = vsel %vm360, %v346, %v352
      %v362 = vsel %vm360, %v348, %v354
      %v363 = vsub.f32 %v358, %v361
      %v364 = vsub.f32 %v359, %v362
      %367 = vrot.lane.b32.xlu0 %v341, 127
      %v368 = vpop.permute.xlu0 %367
      %369 = vrot.lane.b32.xlu0 %v342, 127
      %v370 = vpop.permute.xlu0 %369
      %373 = vrot.lane.b32.xlu0 %v341, 1
      %v374 = vpop.permute.xlu0 %373
      %375 = vrot.lane.b32.xlu0 %v342, 1
      %v376 = vpop.permute.xlu0 %375
      %v379 = vsel %vm360, %v368, %v374
      %v380 = vsel %vm360, %v370, %v376
      %v381 = vmul.f32 %v341, 2.0
      %v382 = vmul.f32 %v342, 2.0
      %v383 = vadd.f32 %v379, %v381
      %v384 = vadd.f32 %v380, %v382
      %v385 = vsel %vm357, %v368, %v374
      %v386 = vsel %vm357, %v370, %v376
      %v387 = vadd.f32 %v383, %v385
      %v388 = vadd.f32 %v384, %v386
      %v389 = vmul.f32 %v363, %v363
      %v390 = vmul.f32 %v364, %v364
      %v391 = vmul.f32 %v387, %v387
      %v392 = vmul.f32 %v388, %v388
      %v393 = vadd.f32 %v389, %v391
      %v394 = vadd.f32 %v390, %v392
      %vm395 = vcmask 130048
      %v396 = vsel %vm395, %v393, inf
      %v397 = vsel %vm395, %v394, inf
      %v398 = vmin.f32 %v396, %v397
      %399 = vmin.xlane.f32.xlu0 %v398
      %v400 = vpop.xlane.xlu0 %399
      %v401 = vrot.slane %v400, 4
      %v402 = vmin.f32 %v400, %v401
      %v403 = vrot.slane %v402, 2
      %v404 = vmin.f32 %v402, %v403
      %v405 = vrot.slane %v404, 1
      %v406 = vmin.f32 %v404, %v405
      %s407 = vtos %v406
      %v408 = vstv %s407
      %409 = vst [vmem:[%s295] sm:$0xff] %v408
      %v410 = vsel %vm395, %v393, -inf
      %v411 = vsel %vm395, %v394, -inf
      %v412 = vmax.f32 %v410, %v411
      %413 = vmax.xlane.f32.xlu0 %v412
      %v414 = vpop.xlane.xlu0 %413
      %v415 = vrot.slane %v414, 4
      %v416 = vmax.f32 %v414, %v415
      %v417 = vrot.slane %v416, 2
      %v418 = vmax.f32 %v416, %v417
      %v419 = vrot.slane %v418, 1
      %v420 = vmax.f32 %v418, %v419
      %s421 = vtos %v420
      %v422 = vstv %s421
      %423 = vst [vmem:[%s306] sm:$0xff] %v422
      %p424 = scmp.lt.s32.totalorder %s20, 1
      %s425 = scalar_select %p424, %s20, 1
      %p426 = scmp.lt.s32.totalorder %s21, 3
      %s427 = scalar_select %p426, %s21, 3
      %p428 = scmp.lt.s32.totalorder %s22, 0
      %s429 = scalar_select %p428, %s22, 0
      %s430 = sadd.s32 %s429, %s427
      %s431 = smul.addr %s425, 4
      %s432 = sadd.s32 %s430, %s431
      %s433 = smul.addr %s432, 8
      %s434 = scalar_lea.vmem %s2, %s433
      %p435 = scmp.lt.s32.totalorder %s20, 1
      %s436 = scalar_select %p435, %s20, 1
      %p437 = scmp.lt.s32.totalorder %s21, 3
      %s438 = scalar_select %p437, %s21, 3
      %p439 = scmp.lt.s32.totalorder %s22, 0
      %s440 = scalar_select %p439, %s22, 0
      %s441 = sadd.s32 %s440, %s438
      %s442 = smul.addr %s436, 4
      %s443 = sadd.s32 %s441, %s442
      %s444 = smul.addr %s443, 8
      %s445 = scalar_lea.vmem %s3, %s444
      // Predicated region
      $region29: #{sobel_filter_opencv.2} parent=27 // pred_check
        %p446 = pneg %p116
      $region30: #{sobel_filter_opencv.2} parent=27 // pred_check_branch
        %448 = sbr.rel (%p446) target = $region32
      $region31: #{sobel_filter_opencv.2} parent=27 // pred_region
        _
      $region32: #{sobel_filter_opencv.2} parent=27 // pred_fallthru
        _
      // Predicated region
      $region33: #{sobel_filter_opencv.2} parent=27 // pred_check
        %p449 = pneg %p146
      $region34: #{sobel_filter_opencv.2} parent=27 // pred_check_branch
        %451 = sbr.rel (%p449) target = $region36
      $region35: #{sobel_filter_opencv.2} parent=27 // pred_region
        _
      $region36: #{sobel_filter_opencv.2} parent=27 // pred_fallthru
        _
    $region28: #{sobel_filter_opencv.2} parent=5 // pred_fallthru
      _
    %p452 = scmp.le.s32.totalorder 2, %s10
    // Predicated region
    $region37: #{sobel_filter_opencv.2} parent=5 // pred_check
      %p453 = pneg %p452
    $region38: #{sobel_filter_opencv.2} parent=5 // pred_check_branch
      %455 = sbr.rel (%p453) target = $region40
    $region39: #{sobel_filter_opencv.2} parent=5 // pred_region
      %s456 = ssub.s32 %s10, 2
      // Predicated region
      $region41: #{sobel_filter_opencv.2} parent=39 // pred_check
        %p457 = pneg %p122
      $region42: #{sobel_filter_opencv.2} parent=39 // pred_check_branch
        %459 = sbr.rel (%p457) target = $region44
      $region43: #{sobel_filter_opencv.2} parent=39 // pred_region
        %p460 = scmp.lt.s32.totalorder %s23, 1
        %s461 = scalar_select %p460, %s23, 1
        %p462 = scmp.lt.s32.totalorder %s24, 3
        %s463 = scalar_select %p462, %s24, 3
        %p464 = scmp.lt.s32.totalorder %s25, 0
        %s465 = scalar_select %p464, %s25, 0
        %s466 = sadd.s32 %s465, %s463
        %s467 = smul.addr %s461, 4
        %s468 = sadd.s32 %s466, %s467
        %s469 = smul.addr %s468, 8
        %s470 = scalar_lea.vmem %s2, %s469
      $region44: #{sobel_filter_opencv.2} parent=39 // pred_fallthru
        _
      // Predicated region
      $region45: #{sobel_filter_opencv.2} parent=39 // pred_check
        %p471 = pneg %p152
      $region46: #{sobel_filter_opencv.2} parent=39 // pred_check_branch
        %473 = sbr.rel (%p471) target = $region48
      $region47: #{sobel_filter_opencv.2} parent=39 // pred_region
        %p474 = scmp.lt.s32.totalorder %s23, 1
        %s475 = scalar_select %p474, %s23, 1
        %p476 = scmp.lt.s32.totalorder %s24, 3
        %s477 = scalar_select %p476, %s24, 3
        %p478 = scmp.lt.s32.totalorder %s25, 0
        %s479 = scalar_select %p478, %s25, 0
        %s480 = sadd.s32 %s479, %s477
        %s481 = smul.addr %s475, 4
        %s482 = sadd.s32 %s480, %s481
        %s483 = smul.addr %s482, 8
        %s484 = scalar_lea.vmem %s3, %s483
      $region48: #{sobel_filter_opencv.2} parent=39 // pred_fallthru
        _
    $region40: #{sobel_filter_opencv.2} parent=5 // pred_fallthru
      _
  $region6: #{sobel_filter_opencv.2} parent=0 // loop_footer
    %s14 = sadd.s32 1, %s10
  $region7: #{sobel_filter_opencv.2} parent=0 // loop_footer_branch
    %9 = sbr.rel target = $region3
  $region8: #{sobel_filter_opencv.2} parent=0 // loop_exit
    _

</llo_original>
